<compile_context>
chip_gen: v7x
topology: tpu7x:2x2x1
jax: 0.10.0
libtpu: 0.0.40
codegen_flags: <defaults>
</compile_context>

<pallas_src>
import functools
import math

import jax
import jax.numpy as jnp
from jax import lax
from jax.experimental import pallas as pl
from jax.experimental.pallas import tpu as pltpu


# ----------------------------------------------------------------------------- helpers
def _round_up(v, m):
    return ((v + m - 1) // m) * m


def _pick_tile(dim, cap, align):
    """Largest multiple of `align` that divides `dim` (itself a multiple of align) and <= cap."""
    cap = max(cap, align)
    best = align
    t = align
    while t <= min(cap, dim):
        if dim % t == 0:
            best = t
        t += align
    return best


def _pad2(a, rows, cols):
    pr, pc = rows - a.shape[0], cols - a.shape[1]
    if pr == 0 and pc == 0:
        return a                      # no copy when already aligned
    return jnp.pad(a, ((0, pr), (0, pc)))


def _counter_bits(cnt_i32, seed_i32):
    """Counter-based pseudo-random 32 bits: murmur3-style finalizer of (counter, seed).

    Pure jnp ops -> lowers on TPU (VPU int ops) and in interpret mode.
    # TODO(synk): on real TPU, pltpu.prng_random_bits/stateful_normal would be
    # cheaper and higher quality, but they have no CPU/interpret lowering.
    """
    x = jnp.bitwise_xor(cnt_i32, seed_i32).astype(jnp.uint32)
    x = (x + jnp.uint32(0x9E3779B9)) * jnp.uint32(0x85EBCA6B)
    x = jnp.bitwise_xor(x, x >> jnp.uint32(13))
    x = x * jnp.uint32(0xC2B2AE35)
    x = jnp.bitwise_xor(x, x >> jnp.uint32(16))
    x = x * jnp.uint32(0x27D4EB2D)
    x = jnp.bitwise_xor(x, x >> jnp.uint32(15))
    return x


def _uniform_from_bits(bits_u32, open_zero):
    u = (bits_u32 >> jnp.uint32(8)).astype(jnp.float32) * jnp.float32(1.0 / 16777216.0)
    if open_zero:                     # map to (0, 1] so log() is finite
        u = u + jnp.float32(1.0 / 16777216.0)
    return u


# ----------------------------------------------------------------------------- kernels
def _bdf_stochastic_kernel(seed_ref, x_ref, wm_ref, lws_ref, b_ref, o_ref,
                           *, chunk_k, k_pad):
    """One (out-tile, in-tile) grid step of the stochastic forward.

    seed_ref : SMEM (1,) int32   base PRNG seed (scalar prefetch)
    x_ref    : (B, tk)           input tile
    wm_ref   : (tn, tk)          weight posterior mean tile
    lws_ref  : (tn, tk)          weight posterior log-sigma tile
    b_ref    : (1, tn) f32       pre-sampled bias tile
    o_ref    : (B, tn) f32       output block (resident across the K axis; used
                                 directly as the accumulator — no scratch)
    """
    i = pl.program_id(0)          # output (N) tile index
    k = pl.program_id(1)          # reduction (K) tile index

    @pl.when(k == 0)
    def _init():                  # bias goes in once, then we accumulate
        o_ref[...] = jnp.zeros(o_ref.shape, o_ref.dtype) + b_ref[...]

    tn, tk = wm_ref.shape
    half = chunk_k // 2
    n_chunks = tk // chunk_k
    seed = seed_ref[0]

    # Global element indexing (independent of tiling): counter = row * K_pad + col.
    row0 = i * tn
    r_ids = lax.broadcasted_iota(jnp.int32, (tn, half), 0) + row0
    c_ids = lax.broadcasted_iota(jnp.int32, (tn, half), 1)
    row_base = r_ids * k_pad      # hoisted out of the chunk loop (no CSE of broadcasts)

    # Static (fully unrolled) chunk loop == lax.fori_loop(..., unroll=True):
    # sample a (tn, chunk_k) noise slab on-chip and immediately feed the MXU.
    acc = None
    for c in range(n_chunks):
        col0 = k * tk + c * chunk_k
        cnt_lo = row_base + (col0 + c_ids)           # counters of the left-half elems
        cnt_hi = row_base + (col0 + half + c_ids)    # counters of the right-half elems
        u1 = _uniform_from_bits(_counter_bits(cnt_lo, seed), open_zero=True)
        u2 = _uniform_from_bits(_counter_bits(cnt_hi, seed), open_zero=False)
        # Box-Muller: two independent N(0,1) draws per (u1, u2) pair.
        r = jnp.sqrt(jnp.float32(-2.0) * jnp.log(u1))
        theta = jnp.float32(2.0 * math.pi) * u2
        eps = jnp.concatenate([r * jnp.cos(theta), r * jnp.sin(theta)], axis=1)

        sl = pl.ds(c * chunk_k, chunk_k)             # static slice -> free ref view
        wm = wm_ref[:, sl].astype(jnp.float32)
        ls = lws_ref[:, sl].astype(jnp.float32)
        w = wm + jnp.exp(ls) * eps                   # sampled weight chunk (tn, ck)
        xc = x_ref[:, sl].astype(jnp.float32)

        # Contract the shared last dim: x (B, ck) with w (tn, ck) -> (B, tn);
        # the MXU consumes the [out, in] chunk directly, no transpose.
        d = lax.dot_general(xc, w,
                            dimension_numbers=(((1,), (1,)), ((), ())),
                            preferred_element_type=jnp.float32)
        acc = d if acc is None else acc + d

    o_ref[...] += acc


def _bdf_deterministic_kernel(x_ref, wm_ref, b_ref, o_ref):
    """Deterministic forward: tiled x @ W_mean.T + b_mean (no sigma / noise streams)."""
    k = pl.program_id(1)

    @pl.when(k == 0)
    def _init():
        o_ref[...] = jnp.zeros(o_ref.shape, o_ref.dtype) + b_ref[...]

    o_ref[...] += lax.dot_general(
        x_ref[...].astype(jnp.float32), wm_ref[...].astype(jnp.float32),
        dimension_numbers=(((1,), (1,)), ((), ())),
        preferred_element_type=jnp.float32)


# ----------------------------------------------------------------------------- wrapper
def bayesian_dense_flipout_forward(x, weights_mean, log_weights_sigma,
                                   bias_mean, log_bias_sigma,
                                   *, stochastic=True, key=None,
                                   tile_n=512, tile_k=512, chunk_k=256):
    """Pallas-TPU forward mirroring BayesianDenseFlipout.forward(x, stochastic). Returns f32."""
    out_features, in_features = weights_mean.shape
    batch = x.shape[0]

    # --- bias sample: tiny O(out) op, hoisted out of the gridded kernel ---
    if stochastic:
        assert key is not None, "need a PRNG key when stochastic=True"
        k_bias, k_seed = jax.random.split(key)
        eps_b = jax.random.normal(k_bias, (out_features,), dtype=jnp.float32)
        bias = (bias_mean.astype(jnp.float32)
                + jnp.exp(log_bias_sigma.astype(jnp.float32)) * eps_b)
        seed = jax.random.randint(k_seed, (1,), 0, jnp.iinfo(jnp.int32).max,
                                  dtype=jnp.int32)
    else:
        bias = bias_mean.astype(jnp.float32)
        seed = None

    # --- light padding only: lane dims to 128, batch to 8; tiles divide padded dims ---
    n_pad = _round_up(out_features, 128)
    k_pad = _round_up(in_features, 128)
    b_pad = _round_up(batch, 8)
    tn = _pick_tile(n_pad, tile_n, 128)
    tk = _pick_tile(k_pad, tile_k, 128)
    ck = _pick_tile(tk, chunk_k, 128)

    # Padded K columns of x are exact zeros, so padded weight columns (even with
    # sampled noise there) contribute nothing; padded output rows are sliced off.
    x_p = _pad2(x, b_pad, k_pad)
    wm_p = _pad2(weights_mean, n_pad, k_pad)
    bias_p = _pad2(bias.reshape(1, out_features), 1, n_pad)

    grid = (n_pad // tn, k_pad // tk)
    compiler_params = pltpu.CompilerParams(
        dimension_semantics=("parallel", "arbitrary"))
    out_shape = jax.ShapeDtypeStruct((b_pad, n_pad), jnp.float32)
    # TODO(synk): for very large batch add a third (parallel) M grid axis so the
    # x / output blocks stay within VMEM; full-batch blocks are fine at these sizes.

    if stochastic:
        lws_p = _pad2(log_weights_sigma, n_pad, k_pad)
        kernel = functools.partial(_bdf_stochastic_kernel, chunk_k=ck, k_pad=k_pad)
        grid_spec = pltpu.PrefetchScalarGridSpec(
            num_scalar_prefetch=1,
            grid=grid,
            in_specs=[
                pl.BlockSpec((b_pad, tk), lambda i, k, s: (0, k)),   # x
                pl.BlockSpec((tn, tk), lambda i, k, s: (i, k)),      # W_mean
                pl.BlockSpec((tn, tk), lambda i, k, s: (i, k)),      # log W_sigma
                pl.BlockSpec((1, tn), lambda i, k, s: (0, i)),       # sampled bias
            ],
            out_specs=pl.BlockSpec((b_pad, tn), lambda i, k, s: (0, i)),
        )
        out_p = pl.pallas_call(
            kernel, out_shape=out_shape, grid_spec=grid_spec,
            compiler_params=compiler_params,
        )(seed, x_p, wm_p, lws_p, bias_p)
    else:
        grid_spec = pltpu.PrefetchScalarGridSpec(
            num_scalar_prefetch=0,
            grid=grid,
            in_specs=[
                pl.BlockSpec((b_pad, tk), lambda i, k: (0, k)),      # x
                pl.BlockSpec((tn, tk), lambda i, k: (i, k)),         # W_mean
                pl.BlockSpec((1, tn), lambda i, k: (0, i)),          # bias_mean
            ],
            out_specs=pl.BlockSpec((b_pad, tn), lambda i, k: (0, i)),
        )
        out_p = pl.pallas_call(
            _bdf_deterministic_kernel, out_shape=out_shape, grid_spec=grid_spec,
            compiler_params=compiler_params,
        )(x_p, wm_p, bias_p)

    return out_p[:batch, :out_features]


def init_params(key, in_features, out_features):
    """Matches the PyTorch __init__: xavier_uniform_ weights_mean, -3.0 log sigmas, 0 bias."""
    bound = math.sqrt(6.0 / (in_features + out_features))
    weights_mean = jax.random.uniform(
        key, (out_features, in_features), minval=-bound, maxval=bound,
        dtype=jnp.float32)
    log_weights_sigma = jnp.full((out_features, in_features), -3.0, jnp.float32)
    bias_mean = jnp.zeros((out_features,), jnp.float32)
    log_bias_sigma = jnp.full((out_features,), -3.0, jnp.float32)
    return weights_mean, log_weights_sigma, bias_mean, log_bias_sigma


if __name__ == "__main__":
    key = jax.random.PRNGKey(0)
    k_param, k_x, k_noise = jax.random.split(key, 3)

    # --- small shapes consistent with the dense module (exercises (8,128) padding) ---
    batch, in_features, out_features = 8, 32, 16
    weights_mean, log_weights_sigma, bias_mean, log_bias_sigma = init_params(
        k_param, in_features, out_features)
    x = jax.random.normal(k_x, (batch, in_features), dtype=jnp.float32)

    y_det = bayesian_dense_flipout_forward(
        x, weights_mean, log_weights_sigma, bias_mean, log_bias_sigma,
        stochastic=False)
    y_stoch = bayesian_dense_flipout_forward(
        x, weights_mean, log_weights_sigma, bias_mean, log_bias_sigma,
        stochastic=True, key=k_noise)
    jax.block_until_ready((y_det, y_stoch))

    y_ref = jnp.dot(x, weights_mean.T, precision=lax.Precision.HIGHEST) + bias_mean
    assert y_det.shape == (batch, out_features)
    assert y_stoch.shape == (batch, out_features)
    assert jnp.allclose(y_det, y_ref, atol=2e-3), "deterministic path mismatch"
    # sigma = exp(-3) ~ 0.05 -> stochastic output is a small, nonzero perturbation.
    diff = float(jnp.max(jnp.abs(y_stoch - y_det)))
    assert 1e-5 < diff < 10.0, f"stochastic perturbation out of range: {diff}"

    # --- larger shape with small tile caps to exercise the (N, K) grid + K accumulation ---
    b2, in2, out2 = 16, 640, 384
    wm2, lws2, bm2, lbs2 = init_params(jax.random.PRNGKey(1), in2, out2)
    x2 = jax.random.normal(jax.random.PRNGKey(2), (b2, in2), dtype=jnp.float32)
    y2_det = bayesian_dense_flipout_forward(
        x2, wm2, lws2, bm2, lbs2, stochastic=False,
        tile_n=128, tile_k=256, chunk_k=128)
    y2_stoch = bayesian_dense_flipout_forward(
        x2, wm2, lws2, bm2, lbs2, stochastic=True, key=jax.random.PRNGKey(3),
        tile_n=128, tile_k=256, chunk_k=128)
    jax.block_until_ready((y2_det, y2_stoch))

    y2_ref = jnp.dot(x2, wm2.T, precision=lax.Precision.HIGHEST) + bm2
    assert jnp.allclose(y2_det, y2_ref, atol=5e-3), "multi-tile deterministic mismatch"
    assert y2_stoch.shape == (b2, out2)
    # Sanity-check the in-kernel Gaussian sampler via the perturbation statistics:
    # std(y_stoch - y_det) ~ exp(-3) * sqrt(in_features * E[x^2] + 1) ~ 1.3 here.
    d2 = y2_stoch - y2_det
    dstd = float(jnp.std(d2))
    dmean = float(jnp.mean(d2))
    assert 0.3 < dstd < 5.0, f"noise std out of expected range: {dstd}"
    assert abs(dmean) < 0.25, f"noise mean too large: {dmean}"

    print("KERNEL_OK")
</pallas_src>

<mosaic_0001>
module attributes {stable_mosaic.version = 11 : i64} {
  func.func @_bdf_deterministic_kernel(%arg0: i32, %arg1: i32, %arg2: memref<8x128xf32, #tpu.memory_space<vmem>>, %arg3: memref<128x128xf32, #tpu.memory_space<vmem>>, %arg4: memref<1x128xf32, #tpu.memory_space<vmem>>, %arg5: memref<8x128xf32, #tpu.memory_space<vmem>>) attributes {dimension_semantics = [#tpu.dimension_semantics<parallel>, #tpu.dimension_semantics<arbitrary>], iteration_bounds = array<i64: 1, 1>, scalar_prefetch = 0 : i64, scratch_operands = 0 : i64, tpu.core_type = #tpu.core_type<tc>, window_params = [{transform_indices = @transform_0, window_bounds = array<i64: 8, 128>}, {transform_indices = @transform_1, window_bounds = array<i64: 128, 128>}, {transform_indices = @transform_2, window_bounds = array<i64: 1, 128>}, {transform_indices = @transform_3, window_bounds = array<i64: 8, 128>}]} {
    %c0_i32 = arith.constant 0 : i32
    %0 = arith.cmpi eq, %arg1, %c0_i32 : i32
    %1 = arith.extui %0 : i1 to i32
    %c0_i32_0 = arith.constant 0 : i32
    %2 = arith.cmpi ne, %1, %c0_i32_0 : i32
    scf.if %2 {
      %cst_8 = arith.constant 0.000000e+00 : f32
      %9 = vector.broadcast %cst_8 : f32 to vector<8x128xf32>
      %c0_9 = arith.constant 0 : index
      %c0_10 = arith.constant 0 : index
      %10 = vector.load %arg4[%c0_9, %c0_10] : memref<1x128xf32, #tpu.memory_space<vmem>>, vector<1x128xf32>
      %11 = vector.broadcast %10 : vector<1x128xf32> to vector<8x128xf32>
      %12 = arith.addf %9, %11 : vector<8x128xf32>
      %c0_11 = arith.constant 0 : index
      %c0_12 = arith.constant 0 : index
      %13 = vector.load %arg5[%c0_11, %c0_12] : memref<8x128xf32, #tpu.memory_space<vmem>>, vector<8x128xf32>
      tpu.vector_store %arg5[%c0_11, %c0_12], %12 {strides = array<i32>} : memref<8x128xf32, #tpu.memory_space<vmem>>, vector<8x128xf32>,
    } else {
    }
    %c0 = arith.constant 0 : index
    %c0_1 = arith.constant 0 : index
    %3 = vector.load %arg5[%c0, %c0_1] : memref<8x128xf32, #tpu.memory_space<vmem>>, vector<8x128xf32>
    %c0_2 = arith.constant 0 : index
    %c0_3 = arith.constant 0 : index
    %4 = vector.load %arg2[%c0_2, %c0_3] : memref<8x128xf32, #tpu.memory_space<vmem>>, vector<8x128xf32>
    %c0_4 = arith.constant 0 : index
    %c0_5 = arith.constant 0 : index
    %5 = vector.load %arg3[%c0_4, %c0_5] : memref<128x128xf32, #tpu.memory_space<vmem>>, vector<128x128xf32>
    %cst = arith.constant dense<0.000000e+00> : vector<8x128xf32>
    %6 = tpu.matmul %4, %5, %cst {dimension_numbers = #tpu.dot_dimension_numbers<[1], [1], [0], [0], [0, 0, 1, 0], [], []>} : vector<8x128xf32>, vector<128x128xf32>, vector<8x128xf32> -> vector<8x128xf32>
    %7 = arith.addf %3, %6 : vector<8x128xf32>
    %c0_6 = arith.constant 0 : index
    %c0_7 = arith.constant 0 : index
    %8 = vector.load %arg5[%c0_6, %c0_7] : memref<8x128xf32, #tpu.memory_space<vmem>>, vector<8x128xf32>
    tpu.vector_store %arg5[%c0_6, %c0_7], %7 {strides = array<i32>} : memref<8x128xf32, #tpu.memory_space<vmem>>, vector<8x128xf32>,
    return
  }
  func.func @transform_0(%arg0: i32, %arg1: i32) -> (i32, i32) {
    %c0_i32 = arith.constant 0 : i32
    %c0_i32_0 = arith.constant 0 : i32
    return %c0_i32, %arg1 : i32, i32
  }
  func.func @transform_1(%arg0: i32, %arg1: i32) -> (i32, i32) {
    %c0_i32 = arith.constant 0 : i32
    return %arg0, %arg1 : i32, i32
  }
  func.func @transform_2(%arg0: i32, %arg1: i32) -> (i32, i32) {
    %c0_i32 = arith.constant 0 : i32
    %c0_i32_0 = arith.constant 0 : i32
    return %c0_i32, %arg0 : i32, i32
  }
  func.func @transform_3(%arg0: i32, %arg1: i32) -> (i32, i32) {
    %c0_i32 = arith.constant 0 : i32
    %c0_i32_0 = arith.constant 0 : i32
    return %c0_i32, %arg0 : i32, i32
  }
}

</mosaic_0001>

<llo_original>
// kernel: tpu_custom_call.1
$region0: #{tpu_custom_call.1}
  #allocation0 [shape = 'u32[]', space=smem, size = 0x4, offset = 0x4, fixed_abs, tag = 'smem constant byte address 0x4 - core index']
  #allocation1 [shape = 'u32[144,128]{1,0:T(1,128)}', space=vmem, size = 0x12000, scoped, tag = 'internal scratch']
  %s0 = inlined_call_operand.hbm [shape: f32[8,128], index: 0, kind: input, shape index: {}]
  %s1 = inlined_call_operand.hbm [shape: f32[128,128], index: 1, kind: input, shape index: {}]
  %s2 = inlined_call_operand.vmem [shape: f32[1,128], index: 2, kind: input, shape index: {}]
  %s3 = inlined_call_operand.hbm [shape: f32[8,128], index: 3, kind: output, shape index: {}]
  %s4 = sld [smem:[#allocation0]]
  $region34: #{tpu_custom_call.1} parent=0
    _
  %s6 = ssub.s32 1, %s4
  %s7 = scalar_select 0, %s6, %s4
  $region1: #{tpu_custom_call.1} parent=0
    #allocation2 [shape = 'u8[4096]{0}', space=vmem, size = 0x1000, scoped, tag = 'input window, operand 0, single buffered']
    #allocation3 [shape = 's32[1]{0}', space=sflag, size = 0x4, scoped, tag = 'scoped memory for tpu_custom_call.1']
    #allocation4 [shape = 's32[1]{0}', space=sflag, size = 0x4, scoped, tag = 'scoped memory for tpu_custom_call.1']
    #allocation5 [shape = 'u8[65536]{0}', space=vmem, size = 0x10000, scoped, tag = 'input window, operand 1, single buffered']
    #allocation6 [shape = 's32[1]{0}', space=sflag, size = 0x4, scoped, tag = 'scoped memory for tpu_custom_call.1']
    #allocation7 [shape = 'u8[4096]{0}', space=vmem, size = 0x1000, scoped, tag = 'output window, operand 0, single buffered']
    %8 = vsyncpa [#allocation3], 0
    %9 = vsyncpa [#allocation6], 0
    %10 = vsyncpa [#allocation4], 0
    // Predicated region
    $region2: #{tpu_custom_call.1} parent=1 // pred_check
      _
    $region3: #{tpu_custom_call.1} parent=1 // pred_check_branch
      %12 = sbr.rel (0) target = $region5
    $region4: #{tpu_custom_call.1} parent=1 // pred_region
      %s14 = ssub.s32 128, 128
      %15 = vsyncadd [#allocation3], %s14
      %s17 = sshll.u32 [#allocation2], 4
      %s18 = int_to_ptr.vmem [resolvable:$true] %s17
      %20 = dma.hbm_to_vmem [thread:$0]  %s0, 128, %s18, [#allocation3]
    $region5: #{tpu_custom_call.1} parent=1 // pred_fallthru
      _
    // Predicated region
    $region6: #{tpu_custom_call.1} parent=1 // pred_check
      _
    $region7: #{tpu_custom_call.1} parent=1 // pred_check_branch
      %22 = sbr.rel (0) target = $region9
    $region8: #{tpu_custom_call.1} parent=1 // pred_region
      %s24 = ssub.s32 2048, 2048
      %25 = vsyncadd [#allocation6], %s24
      %s26 = sshll.u32 [#allocation5], 4
      %s27 = int_to_ptr.vmem [resolvable:$true] %s26
      %32 = dma.hbm_to_vmem [thread:$0]  %s1, 2048, %s27, [#allocation6], 128, 128, 8
    $region9: #{tpu_custom_call.1} parent=1 // pred_fallthru
      _
    // Predicated region
    $region10: #{tpu_custom_call.1} parent=1 // pred_check
      _
    $region11: #{tpu_custom_call.1} parent=1 // pred_check_branch
      %34 = sbr.rel (0) target = $region13
    $region12: #{tpu_custom_call.1} parent=1 // pred_region
      _
    $region13: #{tpu_custom_call.1} parent=1 // pred_fallthru
      _
    // Predicated region
    $region14: #{tpu_custom_call.1} parent=1 // pred_check
      _
    $region15: #{tpu_custom_call.1} parent=1 // pred_check_branch
      %36 = sbr.rel (0) target = $region17
    $region16: #{tpu_custom_call.1} parent=1 // pred_region
      %37 = dma.done [#allocation3], 128
    $region17: #{tpu_custom_call.1} parent=1 // pred_fallthru
      _
    // Predicated region
    $region18: #{tpu_custom_call.1} parent=1 // pred_check
      _
    $region19: #{tpu_custom_call.1} parent=1 // pred_check_branch
      %39 = sbr.rel (0) target = $region21
    $region20: #{tpu_custom_call.1} parent=1 // pred_region
      %40 = dma.done [#allocation6], 2048
    $region21: #{tpu_custom_call.1} parent=1 // pred_fallthru
      _
    %p41 = scmp.eq.s32.totalorder 0, 0
    // Predicated region
    $region22: #{tpu_custom_call.1} parent=1 // pred_check
      %p42 = pneg %p41
    $region23: #{tpu_custom_call.1} parent=1 // pred_check_branch
      %44 = sbr.rel (%p42) target = $region25
    $region24: #{tpu_custom_call.1} parent=1 // pred_region
      %v45 = vld [vmem:[%s2] sm:$0x1]
      %v47 = vlaneseq
      %v48 = vshrl.u32 %v47, 7
      %v49 = vsub.s32 0, %v48
      %v50 = vrot.slane %v45, %v49
      %v52 = vadd.f32 %v50, 0.0
      %53 = vst [vmem:[#allocation7] sm:$0xff] %v52
    $region25: #{tpu_custom_call.1} parent=1 // pred_fallthru
      _
    %v54 = vld [vmem:[#allocation7] sm:$0xff]
    %v55 = vld [vmem:[#allocation2] sm:$0xff]
    %v56 = vld [vmem:[#allocation5] sm:$0xff]
    %v57 = vld [vmem:[#allocation5 + $0x8] sm:$0xff]
    %v58 = vld [vmem:[#allocation5 + $0x10] sm:$0xff]
    %v59 = vld [vmem:[#allocation5 + $0x18] sm:$0xff]
    %v60 = vld [vmem:[#allocation5 + $0x20] sm:$0xff]
    %v61 = vld [vmem:[#allocation5 + $0x28] sm:$0xff]
    %v62 = vld [vmem:[#allocation5 + $0x30] sm:$0xff]
    %v63 = vld [vmem:[#allocation5 + $0x38] sm:$0xff]
    %v64 = vld [vmem:[#allocation5 + $0x40] sm:$0xff]
    %v65 = vld [vmem:[#allocation5 + $0x48] sm:$0xff]
    %v66 = vld [vmem:[#allocation5 + $0x50] sm:$0xff]
    %v67 = vld [vmem:[#allocation5 + $0x58] sm:$0xff]
    %v68 = vld [vmem:[#allocation5 + $0x60] sm:$0xff]
    %v69 = vld [vmem:[#allocation5 + $0x68] sm:$0xff]
    %v70 = vld [vmem:[#allocation5 + $0x70] sm:$0xff]
    %v71 = vld [vmem:[#allocation5 + $0x78] sm:$0xff]
    %72 = vmatprep.subr.mxu0 0.0
    %73 = vmatpush1.xpose.msra.mxu0 %v56
    %74 = vmatprep.subr.mxu0 0.0
    %75 = vmatpush1.xpose.msra.mxu0 %v57
    %76 = vmatprep.subr.mxu0 0.0
    %77 = vmatpush1.xpose.msra.mxu0 %v58
    %78 = vmatprep.subr.mxu0 0.0
    %79 = vmatpush1.xpose.msra.mxu0 %v59
    %80 = vmatprep.subr.mxu0 0.0
    %81 = vmatpush1.xpose.msra.mxu0 %v60
    %82 = vmatprep.subr.mxu0 0.0
    %83 = vmatpush1.xpose.msra.mxu0 %v61
    %84 = vmatprep.subr.mxu0 0.0
    %85 = vmatpush1.xpose.msra.mxu0 %v62
    %86 = vmatprep.subr.mxu0 0.0
    %87 = vmatpush1.xpose.msra.mxu0 %v63
    %88 = vmatprep.subr.mxu0 0.0
    %89 = vmatpush1.xpose.msra.mxu0 %v64
    %90 = vmatprep.subr.mxu0 0.0
    %91 = vmatpush1.xpose.msra.mxu0 %v65
    %92 = vmatprep.subr.mxu0 0.0
    %93 = vmatpush1.xpose.msra.mxu0 %v66
    %94 = vmatprep.subr.mxu0 0.0
    %95 = vmatpush1.xpose.msra.mxu0 %v67
    %96 = vmatprep.subr.mxu0 0.0
    %97 = vmatpush1.xpose.msra.mxu0 %v68
    %98 = vmatprep.subr.mxu0 0.0
    %99 = vmatpush1.xpose.msra.mxu0 %v69
    %100 = vmatprep.subr.mxu0 0.0
    %101 = vmatpush1.xpose.msra.mxu0 %v70
    %102 = vmatprep.subr.mxu0 0.0
    %103 = vmatpush1.xpose.msra.mxu0 %v71
    %104 = vmatprep.subr.mxu0 0.0
    %105 = vmatpush1.xpose.msra.mxu0 0.0
    %106 = vmatprep.subr.mxu0 0.0
    %107 = vmatpush1.xpose.msra.mxu0 0.0
    %108 = vmatprep.subr.mxu0 0.0
    %109 = vmatpush1.xpose.msra.mxu0 0.0
    %110 = vmatprep.subr.mxu0 0.0
    %111 = vmatpush1.xpose.msra.mxu0 0.0
    %112 = vmatprep.subr.mxu0 0.0
    %113 = vmatpush1.xpose.msra.mxu0 0.0
    %114 = vmatprep.subr.mxu0 0.0
    %115 = vmatpush1.xpose.msra.mxu0 0.0
    %116 = vmatprep.subr.mxu0 0.0
    %117 = vmatpush1.xpose.msra.mxu0 0.0
    %118 = vmatprep.subr.mxu0 0.0
    %119 = vmatpush1.xpose.msra.mxu0 0.0
    %120 = vmatprep.subr.mxu0 0.0
    %121 = vmatpush1.xpose.msra.mxu0 0.0
    %122 = vmatprep.subr.mxu0 0.0
    %123 = vmatpush1.xpose.msra.mxu0 0.0
    %124 = vmatprep.subr.mxu0 0.0
    %125 = vmatpush1.xpose.msra.mxu0 0.0
    %126 = vmatprep.subr.mxu0 0.0
    %127 = vmatpush1.xpose.msra.mxu0 0.0
    %128 = vmatprep.subr.mxu0 0.0
    %129 = vmatpush1.xpose.msra.mxu0 0.0
    %130 = vmatprep.subr.mxu0 0.0
    %131 = vmatpush1.xpose.msra.mxu0 0.0
    %132 = vmatprep.subr.mxu0 0.0
    %133 = vmatpush1.xpose.msra.mxu0 0.0
    %134 = vmatprep.subr.mxu0 0.0
    %135 = vmatpush1.xpose.msra.mxu0 0.0
    %136 = vmatprep.mubr.f32.mxu0 0.0
    %137 = vmatmul.mubr.f32.gmra.mrb[0].mxu0 %v55
    %v138 = vpop.f32.mrb[0].mxu0
    %v139 = vadd.f32 0.0, %v138
    %v140 = vpop.f32.mrb[0].mxu0
    %141 = vdwg.mxu0
    %v142 = vadd.f32 %v54, %v139
    %143 = vst [vmem:[#allocation7] sm:$0xff] %v142
    // Predicated region
    $region26: #{tpu_custom_call.1} parent=1 // pred_check
      _
    $region27: #{tpu_custom_call.1} parent=1 // pred_check_branch
      %145 = sbr.rel (0) target = $region29
    $region28: #{tpu_custom_call.1} parent=1 // pred_region
      %s147 = ssub.s32 128, 128
      %148 = vsyncadd [#allocation4], %s147
      %s150 = sshll.u32 [#allocation7], 4
      %s151 = int_to_ptr.vmem [resolvable:$true] %s150
      %153 = dma.vmem_to_hbm [thread:$0]  %s151, 128, %s3, [#allocation4]
    $region29: #{tpu_custom_call.1} parent=1 // pred_fallthru
      _
    // Predicated region
    $region30: #{tpu_custom_call.1} parent=1 // pred_check
      _
    $region31: #{tpu_custom_call.1} parent=1 // pred_check_branch
      %155 = sbr.rel (0) target = $region33
    $region32: #{tpu_custom_call.1} parent=1 // pred_region
      %156 = dma.done [#allocation4], 128
    $region33: #{tpu_custom_call.1} parent=1 // pred_fallthru
      _
    %157 = vsyncpa [#allocation3], 1
    %158 = vsyncpa [#allocation6], 1
    %159 = vsyncpa [#allocation4], 1

</llo_original>
